<compile_context>
chip_gen: v7x
topology: tpu7x:2x2x1
jax: 0.10.0
libtpu: 0.0.40
codegen_flags: <defaults>
</compile_context>

<pallas_src>
import math

import jax
import jax.numpy as jnp
from jax import lax
from jax.experimental import pallas as pl
from jax.experimental.pallas import tpu as pltpu

S_SCALE = 30.0
M_ARC = 0.5
_COS_M = math.cos(M_ARC)
_SIN_M = math.sin(M_ARC)
_TH = math.cos(math.pi - M_ARC)
_MM = math.sin(math.pi - M_ARC) * M_ARC
_EPS = 1e-12  # F.normalize eps

_SUBLANE = 8     # f32 sublane granule
_LANE = 128

_VMEM_CAP_CACHE = None


def _round_up(x, m):
    return ((x + m - 1) // m) * m


def _vmem_capacity_bytes():
    """Per-core VMEM capacity (generation-aware); conservative fallback if unqueryable."""
    global _VMEM_CAP_CACHE
    if _VMEM_CAP_CACHE is None:
        cap = 64 * 1024 * 1024                    # v7x per-TensorCore VMEM (smallest of v5e/v6e/v7x)
        try:
            cap = int(pltpu.get_tpu_info().vmem_capacity_bytes)
        except Exception:
            pass
        _VMEM_CAP_CACHE = cap
    return _VMEM_CAP_CACHE


def _vmem_limit_bytes():
    return min(_vmem_capacity_bytes() * 3 // 4, 96 * 1024 * 1024)


def _class_tile_limit(feat_dim):
    """Largest class-tile width s.t. double-buffered bf16 (F x tile_c) weight tiles <= ~VMEM/8."""
    vmem = _vmem_capacity_bytes()
    per_buf = max(vmem // 16, 1 << 20)
    cols = per_buf // (max(feat_dim, 1) * 2)          # bf16 bytes per class column
    cols = min(cols, 2048 if vmem <= (96 << 20) else 4096)
    return max(2 * _LANE, (cols // (2 * _LANE)) * (2 * _LANE))


def _tiling(num_classes, feat_dim):
    """(padded class count, class tile).  Single full-extent tile for small class counts."""
    limit = _class_tile_limit(feat_dim)
    if num_classes <= limit:
        return num_classes, num_classes
    return _round_up(num_classes, limit), limit


# --------------------------------------------------------------------------- kernels
def _fc_kernel(feat_ref, w_ref, b_ref, out_ref):
    # logits[:, tile_j] = feat @ W_fc^T[:, tile_j] + b[tile_j]
    w = w_ref[...]                                         # (F, tile_c) bf16 streamed tile
    out_ref[...] = (
        jnp.dot(feat_ref[...].astype(w.dtype), w, preferred_element_type=jnp.float32)
        + b_ref[...]
    )


def _arcface_kernel(feat_ref, w_ref, b_ref, inv_ref, label_ref, out_ref):
    j = pl.program_id(0)

    # cosine[:, tile_j] = (feat @ W_comb[:, tile_j] + b_comb[tile_j]) * inv_norm
    #   where W_comb = W_fc^T @ normalize(W_arc)^T  (folded once at param-prep time)
    w = w_ref[...]                                         # (F, tile_c) bf16 streamed tile
    z = (
        jnp.dot(feat_ref[...].astype(w.dtype), w, preferred_element_type=jnp.float32)
        + b_ref[...]
    )
    cosine = z * inv_ref[...]                              # (B, tc) * (B, 1)

    sine = jnp.sqrt(jnp.clip(1.0 - cosine * cosine, 0.0, 1.0))
    phi = cosine * _COS_M - sine * _SIN_M                  # cos(theta + m)
    phi = jnp.where(cosine > _TH, phi, cosine - _MM)       # hard-margin fallback

    b, tc = cosine.shape
    col = j * tc + lax.broadcasted_iota(jnp.int32, (b, tc), 1)
    out_ref[...] = S_SCALE * jnp.where(col == label_ref[...], phi, cosine)


# --------------------------------------------------------------------------- param prep (hoisted)
def prepare_nethead_params(w_fc, b_fc, w_arc, weight_dtype=jnp.bfloat16):
    """One-time weight layout prep, hoisted out of the per-forward hot path.

    Returns:
      w_fc_t  (F, C_pad)  = pad(W_fc^T)                          fc matmul weight (weight_dtype)
      b_fc    (1, C_pad)                                          fc bias (f32)
      w_comb  (F, C_pad)  = pad(W_fc^T @ normalize(W_arc)^T)      folded ArcFace weight (weight_dtype)
      b_comb  (1, C_pad)  = pad(b_fc @ normalize(W_arc)^T)        folded ArcFace bias (f32)
    """
    w_fc = jnp.asarray(w_fc, jnp.float32)
    b_fc = jnp.asarray(b_fc, jnp.float32)
    w_arc = jnp.asarray(w_arc, jnp.float32)
    num_classes, feat_dim = w_fc.shape
    c_pad, _ = _tiling(num_classes, feat_dim)

    # ArcFace weight row-normalization (F.normalize(weight)) -- data independent.
    w_n = w_arc / jnp.maximum(jnp.linalg.norm(w_arc, axis=1, keepdims=True), _EPS)

    w_fc_t = w_fc.T                                        # (F, C)
    w_comb = w_fc_t @ w_n.T                                # (F, C)   algebraic fold (f32)
    b_comb = b_fc @ w_n.T                                  # (C,)

    def pad_cols(a, dtype):
        out = jnp.zeros(a.shape[:-1] + (c_pad,), dtype)
        return out.at[..., :num_classes].set(a.astype(dtype))

    return {
        "w_fc_t": pad_cols(w_fc_t, weight_dtype),
        "b_fc": pad_cols(b_fc[None, :], jnp.float32),
        "w_comb": pad_cols(w_comb, weight_dtype),
        "b_comb": pad_cols(b_comb[None, :], jnp.float32),
    }


# --------------------------------------------------------------------------- forward (hot path)
def nethead_forward(feat, params, label=None, *, num_classes):
    """Returns (embedding, out); embedding = backbone features (the hooked output).

    out = ArcFace(fc(feat), label) if label is given, else fc(feat) (matches torch forward).
    """
    feat = jnp.asarray(feat, jnp.float32)
    B, F = feat.shape
    C = num_classes
    C_pad, tile_c = _tiling(C, F)
    n_tiles = C_pad // tile_c
    B_pad = _round_up(max(B, _SUBLANE), _SUBLANE)
    assert params["w_fc_t"].shape == (F, C_pad)

    feat_p = jnp.zeros((B_pad, F), jnp.float32).at[:B].set(feat)

    # TODO(synk): on v7x consider pltpu.CORE_PARALLEL on the class axis so the two TensorCores
    # each stream half the class tiles; plain "parallel" is a no-op on single-TC parts.
    cparams = pltpu.CompilerParams(
        dimension_semantics=("parallel",),
        vmem_limit_bytes=_vmem_limit_bytes(),
    )

    # ---- fc: class-tiled logits = feat @ W_fc^T + b ---------------------------------
    logits_p = pl.pallas_call(
        _fc_kernel,
        out_shape=jax.ShapeDtypeStruct((B_pad, C_pad), jnp.float32),
        grid=(n_tiles,),
        in_specs=[
            pl.BlockSpec((B_pad, F), lambda j: (0, 0)),        # feat: resident
            pl.BlockSpec((F, tile_c), lambda j: (0, j)),       # W_fc^T tile (bf16 stream)
            pl.BlockSpec((1, tile_c), lambda j: (0, j)),       # bias tile
        ],
        out_specs=pl.BlockSpec((B_pad, tile_c), lambda j: (0, j)),
        compiler_params=cparams,
    )(feat_p, params["w_fc_t"], params["b_fc"])

    if label is None:
        return feat, logits_p[:B, :C]

    # Global row-norm of the fc logits (F.normalize denominator), computed exactly once.
    # Padded logits columns are exactly zero, so the padded sum equals the true sum.
    inv_norm = lax.rsqrt(
        jnp.maximum(jnp.sum(logits_p * logits_p, axis=-1, keepdims=True), _EPS * _EPS)
    )

    label_p = jnp.zeros((B_pad, 1), jnp.int32).at[:B, 0].set(label.astype(jnp.int32))

    # ---- ArcFace: class-tiled margin logits over the folded (F, C) weight ------------
    arc_p = pl.pallas_call(
        _arcface_kernel,
        out_shape=jax.ShapeDtypeStruct((B_pad, C_pad), jnp.float32),
        grid=(n_tiles,),
        in_specs=[
            pl.BlockSpec((B_pad, F), lambda j: (0, 0)),        # feat: resident
            pl.BlockSpec((F, tile_c), lambda j: (0, j)),       # W_comb tile (bf16 stream)
            pl.BlockSpec((1, tile_c), lambda j: (0, j)),       # b_comb tile
            pl.BlockSpec((B_pad, 1), lambda j: (0, 0)),        # inv_norm: resident
            pl.BlockSpec((B_pad, 1), lambda j: (0, 0)),        # labels: resident
        ],
        out_specs=pl.BlockSpec((B_pad, tile_c), lambda j: (0, j)),
        compiler_params=cparams,
    )(feat_p, params["w_comb"], params["b_comb"], inv_norm, label_p)

    return feat, arc_p[:B, :C]


# --------------------------------------------------------------------------- references (test only)
def _emulated_forward(feat, params, label, num_classes):
    """Pure-JAX mirror of the kernels' precision choices (bf16 matmul operands, f32 accum/epilogue)."""
    wdt = params["w_fc_t"].dtype
    feat_q = feat.astype(jnp.float32).astype(wdt)
    logits = jnp.dot(feat_q, params["w_fc_t"], preferred_element_type=jnp.float32) + params["b_fc"]
    inv_norm = lax.rsqrt(jnp.maximum(jnp.sum(logits * logits, axis=-1, keepdims=True), _EPS * _EPS))
    z = jnp.dot(feat_q, params["w_comb"], preferred_element_type=jnp.float32) + params["b_comb"]
    cos = z * inv_norm
    sin = jnp.sqrt(jnp.clip(1.0 - cos * cos, 0.0, 1.0))
    phi = jnp.where(cos > _TH, cos * _COS_M - sin * _SIN_M, cos - _MM)
    col = jnp.arange(cos.shape[1])[None, :]
    out = S_SCALE * jnp.where(col == label[:, None], phi, cos)
    return out[:, :num_classes], logits[:, :num_classes]


def init_params(key, in_features, num_classes):
    k1, k2, k3, k4 = jax.random.split(key, 4)
    bound = 1.0 / math.sqrt(in_features)              # nn.Linear default init
    w_fc = jax.random.uniform(k1, (num_classes, in_features), jnp.float32, -bound, bound)
    b_fc = jax.random.uniform(k2, (num_classes,), jnp.float32, -bound, bound)
    w_arc = jax.random.normal(k3, (num_classes, num_classes), jnp.float32) * 0.1
    return w_fc, b_fc, w_arc, k4


if __name__ == "__main__":
    B = 2     # batch
    F = 32    # backbone feature width (resnet18 would be 512; small synthetic stand-in)
    C = 8     # num_classes

    key = jax.random.PRNGKey(0)
    w_fc, b_fc, w_arc, key = init_params(key, F, C)
    kf, kl = jax.random.split(key)
    feat = jax.random.normal(kf, (B, F), jnp.float32)      # backbone features (B, F)
    label = jax.random.randint(kl, (B,), 0, C, jnp.int32)

    # One-time weight layout prep (transpose / normalize / fold / pad / bf16), out of hot path.
    params = prepare_nethead_params(w_fc, b_fc, w_arc)
    jax.block_until_ready(params)

    fwd = jax.jit(nethead_forward, static_argnames=("num_classes",))

    embedding, arc_out = fwd(feat, params, label, num_classes=C)       # ArcFace (label) path
    jax.block_until_ready((embedding, arc_out))
    _, logits_out = fwd(feat, params, None, num_classes=C)             # label-less path
    jax.block_until_ready(logits_out)

    # ---- pure-f32 PyTorch-semantics reference (un-folded algebra) --------------------
    logits_ref = feat @ w_fc.T + b_fc
    x_n = logits_ref / jnp.maximum(jnp.linalg.norm(logits_ref, axis=1, keepdims=True), _EPS)
    w_n = w_arc / jnp.maximum(jnp.linalg.norm(w_arc, axis=1, keepdims=True), _EPS)
    cos = x_n @ w_n.T
    sin = jnp.sqrt(jnp.clip(1.0 - cos * cos, 0.0, 1.0))
    phi = jnp.where(cos > _TH, cos * _COS_M - sin * _SIN_M, cos - _MM)
    one_hot = jax.nn.one_hot(label, C, dtype=jnp.float32)
    ref_f32 = S_SCALE * (one_hot * phi + (1.0 - one_hot) * cos)

    # ---- precision-matched reference (same bf16 weights / folded algebra as kernels) --
    ref_tight, logits_tight = _emulated_forward(feat, params, label, C)

    assert embedding.shape == (B, F)
    assert arc_out.shape == (B, C) and logits_out.shape == (B, C)
    assert bool(jnp.all(jnp.isfinite(arc_out)))
    # Exact kernel check (mirrors the kernels' own precision choices).
    assert bool(jnp.allclose(arc_out, ref_tight, atol=1e-3, rtol=1e-3))
    assert bool(jnp.allclose(logits_out, logits_tight, atol=1e-3, rtol=1e-3))
    # Algorithm check vs. the full-f32 torch-semantics reference (loose: bf16 weight stream).
    assert bool(jnp.allclose(arc_out, ref_f32, atol=3e-1, rtol=3e-2))
    assert bool(jnp.allclose(logits_out, logits_ref, atol=3e-2, rtol=3e-2))
    print("KERNEL_OK")
</pallas_src>

<mosaic_0001>
module attributes {stable_mosaic.version = 11 : i64} {
  func.func @_fc_kernel(%arg0: i32, %arg1: memref<8x32xf32, #tpu.memory_space<vmem>>, %arg2: memref<32x8xbf16, #tpu.memory_space<vmem>>, %arg3: memref<1x8xf32, #tpu.memory_space<vmem>>, %arg4: memref<8x8xf32, #tpu.memory_space<vmem>>) attributes {dimension_semantics = [#tpu.dimension_semantics<parallel>], iteration_bounds = array<i64: 1>, scalar_prefetch = 0 : i64, scratch_operands = 0 : i64, tpu.core_type = #tpu.core_type<tc>, window_params = [{pipeline_mode = #tpu.pipeline_mode<synchronous>, transform_indices = @transform_0, window_bounds = array<i64: 8, 32>}, {transform_indices = @transform_1, window_bounds = array<i64: 32, 8>}, {transform_indices = @transform_2, window_bounds = array<i64: 1, 8>}, {transform_indices = @transform_3, window_bounds = array<i64: 8, 8>}]} {
    %c0 = arith.constant 0 : index
    %c0_0 = arith.constant 0 : index
    %0 = vector.load %arg2[%c0, %c0_0] : memref<32x8xbf16, #tpu.memory_space<vmem>>, vector<32x8xbf16>
    %c0_1 = arith.constant 0 : index
    %c0_2 = arith.constant 0 : index
    %1 = vector.load %arg1[%c0_1, %c0_2] : memref<8x32xf32, #tpu.memory_space<vmem>>, vector<8x32xf32>
    %2 = arith.truncf %1 : vector<8x32xf32> to vector<8x32xbf16>
    %cst = arith.constant dense<0.000000e+00> : vector<8x8xf32>
    %3 = tpu.matmul %2, %0, %cst {dimension_numbers = #tpu.dot_dimension_numbers<[1], [0], [0], [1], [0, 0, 1, 1], [], []>} : vector<8x32xbf16>, vector<32x8xbf16>, vector<8x8xf32> -> vector<8x8xf32>
    %c0_3 = arith.constant 0 : index
    %c0_4 = arith.constant 0 : index
    %4 = vector.load %arg3[%c0_3, %c0_4] : memref<1x8xf32, #tpu.memory_space<vmem>>, vector<1x8xf32>
    %5 = vector.broadcast %4 : vector<1x8xf32> to vector<8x8xf32>
    %6 = arith.addf %3, %5 : vector<8x8xf32>
    %c0_5 = arith.constant 0 : index
    %c0_6 = arith.constant 0 : index
    %7 = vector.load %arg4[%c0_5, %c0_6] : memref<8x8xf32, #tpu.memory_space<vmem>>, vector<8x8xf32>
    tpu.vector_store %arg4[%c0_5, %c0_6], %6 {strides = array<i32>} : memref<8x8xf32, #tpu.memory_space<vmem>>, vector<8x8xf32>,
    return
  }
  func.func @transform_0(%arg0: i32) -> (i32, i32) {
    %c0_i32 = arith.constant 0 : i32
    %c0_i32_0 = arith.constant 0 : i32
    %c0_i32_1 = arith.constant 0 : i32
    return %c0_i32, %c0_i32_0 : i32, i32
  }
  func.func @transform_1(%arg0: i32) -> (i32, i32) {
    %c0_i32 = arith.constant 0 : i32
    %c0_i32_0 = arith.constant 0 : i32
    return %c0_i32, %arg0 : i32, i32
  }
  func.func @transform_2(%arg0: i32) -> (i32, i32) {
    %c0_i32 = arith.constant 0 : i32
    %c0_i32_0 = arith.constant 0 : i32
    return %c0_i32, %arg0 : i32, i32
  }
  func.func @transform_3(%arg0: i32) -> (i32, i32) {
    %c0_i32 = arith.constant 0 : i32
    %c0_i32_0 = arith.constant 0 : i32
    return %c0_i32, %arg0 : i32, i32
  }
}

module attributes {stable_mosaic.version = 11 : i64} {
  func.func @_arcface_kernel(%arg0: i32, %arg1: memref<8x32xf32, #tpu.memory_space<vmem>>, %arg2: memref<32x8xbf16, #tpu.memory_space<vmem>>, %arg3: memref<1x8xf32, #tpu.memory_space<vmem>>, %arg4: memref<8x1xf32, #tpu.memory_space<vmem>>, %arg5: memref<8x1xi32, #tpu.memory_space<vmem>>, %arg6: memref<8x8xf32, #tpu.memory_space<vmem>>) attributes {dimension_semantics = [#tpu.dimension_semantics<parallel>], iteration_bounds = array<i64: 1>, scalar_prefetch = 0 : i64, scratch_operands = 0 : i64, tpu.core_type = #tpu.core_type<tc>, window_params = [{pipeline_mode = #tpu.pipeline_mode<synchronous>, transform_indices = @transform_0, window_bounds = array<i64: 8, 32>}, {transform_indices = @transform_1, window_bounds = array<i64: 32, 8>}, {transform_indices = @transform_2, window_bounds = array<i64: 1, 8>}, {pipeline_mode = #tpu.pipeline_mode<synchronous>, transform_indices = @transform_3, window_bounds = array<i64: 8, 1>}, {pipeline_mode = #tpu.pipeline_mode<synchronous>, transform_indices = @transform_4, window_bounds = array<i64: 8, 1>}, {transform_indices = @transform_5, window_bounds = array<i64: 8, 8>}]} {
    %c0 = arith.constant 0 : index
    %c0_0 = arith.constant 0 : index
    %0 = vector.load %arg2[%c0, %c0_0] : memref<32x8xbf16, #tpu.memory_space<vmem>>, vector<32x8xbf16>
    %c0_1 = arith.constant 0 : index
    %c0_2 = arith.constant 0 : index
    %1 = vector.load %arg1[%c0_1, %c0_2] : memref<8x32xf32, #tpu.memory_space<vmem>>, vector<8x32xf32>
    %2 = arith.truncf %1 : vector<8x32xf32> to vector<8x32xbf16>
    %cst = arith.constant dense<0.000000e+00> : vector<8x8xf32>
    %3 = tpu.matmul %2, %0, %cst {dimension_numbers = #tpu.dot_dimension_numbers<[1], [0], [0], [1], [0, 0, 1, 1], [], []>} : vector<8x32xbf16>, vector<32x8xbf16>, vector<8x8xf32> -> vector<8x8xf32>
    %c0_3 = arith.constant 0 : index
    %c0_4 = arith.constant 0 : index
    %4 = vector.load %arg3[%c0_3, %c0_4] : memref<1x8xf32, #tpu.memory_space<vmem>>, vector<1x8xf32>
    %5 = vector.broadcast %4 : vector<1x8xf32> to vector<8x8xf32>
    %6 = arith.addf %3, %5 : vector<8x8xf32>
    %c0_5 = arith.constant 0 : index
    %c0_6 = arith.constant 0 : index
    %7 = vector.load %arg4[%c0_5, %c0_6] : memref<8x1xf32, #tpu.memory_space<vmem>>, vector<8x1xf32>
    %8 = vector.broadcast %7 : vector<8x1xf32> to vector<8x8xf32>
    %9 = arith.mulf %6, %8 : vector<8x8xf32>
    %10 = arith.mulf %9, %9 : vector<8x8xf32>
    %cst_7 = arith.constant 1.000000e+00 : f32
    %11 = vector.broadcast %cst_7 : f32 to vector<8x8xf32>
    %12 = arith.subf %11, %10 : vector<8x8xf32>
    %cst_8 = arith.constant 0.000000e+00 : f32
    %cst_9 = arith.constant 1.000000e+00 : f32
    %13 = vector.broadcast %cst_8 : f32 to vector<8x8xf32>
    %14 = arith.maximumf %13, %12 : vector<8x8xf32>
    %15 = vector.broadcast %cst_9 : f32 to vector<8x8xf32>
    %16 = arith.minimumf %15, %14 : vector<8x8xf32>
    %17 = math.sqrt %16 : vector<8x8xf32>
    %cst_10 = arith.constant 0.87758255 : f32
    %18 = vector.broadcast %cst_10 : f32 to vector<8x8xf32>
    %19 = arith.mulf %9, %18 : vector<8x8xf32>
    %cst_11 = arith.constant 0.47942555 : f32
    %20 = vector.broadcast %cst_11 : f32 to vector<8x8xf32>
    %21 = arith.mulf %17, %20 : vector<8x8xf32>
    %22 = arith.subf %19, %21 : vector<8x8xf32>
    %cst_12 = arith.constant -0.87758255 : f32
    %23 = vector.broadcast %cst_12 : f32 to vector<8x8xf32>
    %24 = arith.cmpf ogt, %9, %23 : vector<8x8xf32>
    %cst_13 = arith.constant 0.239712775 : f32
    %25 = vector.broadcast %cst_13 : f32 to vector<8x8xf32>
    %26 = arith.subf %9, %25 : vector<8x8xf32>
    %27 = arith.select %24, %22, %26 : vector<8x8xi1>, vector<8x8xf32>
    %c8_i32 = arith.constant 8 : i32
    %28 = arith.muli %arg0, %c8_i32 : i32
    %29 = tpu.iota {dimensions = array<i32: 1>} : vector<8x8xi32>
    %30 = vector.broadcast %28 : i32 to vector<8x8xi32>
    %31 = arith.addi %30, %29 : vector<8x8xi32>
    %c0_14 = arith.constant 0 : index
    %c0_15 = arith.constant 0 : index
    %32 = vector.load %arg5[%c0_14, %c0_15] : memref<8x1xi32, #tpu.memory_space<vmem>>, vector<8x1xi32>
    %33 = vector.broadcast %32 : vector<8x1xi32> to vector<8x8xi32>
    %34 = arith.cmpi eq, %31, %33 : vector<8x8xi32>
    %35 = arith.select %34, %27, %9 : vector<8x8xi1>, vector<8x8xf32>
    %cst_16 = arith.constant 3.000000e+01 : f32
    %36 = vector.broadcast %cst_16 : f32 to vector<8x8xf32>
    %37 = arith.mulf %36, %35 : vector<8x8xf32>
    %c0_17 = arith.constant 0 : index
    %c0_18 = arith.constant 0 : index
    %38 = vector.load %arg6[%c0_17, %c0_18] : memref<8x8xf32, #tpu.memory_space<vmem>>, vector<8x8xf32>
    tpu.vector_store %arg6[%c0_17, %c0_18], %37 {strides = array<i32>} : memref<8x8xf32, #tpu.memory_space<vmem>>, vector<8x8xf32>,
    return
  }
  func.func @transform_0(%arg0: i32) -> (i32, i32) {
    %c0_i32 = arith.constant 0 : i32
    %c0_i32_0 = arith.constant 0 : i32
    %c0_i32_1 = arith.constant 0 : i32
    return %c0_i32, %c0_i32_0 : i32, i32
  }
  func.func @transform_1(%arg0: i32) -> (i32, i32) {
    %c0_i32 = arith.constant 0 : i32
    %c0_i32_0 = arith.constant 0 : i32
    return %c0_i32, %arg0 : i32, i32
  }
  func.func @transform_2(%arg0: i32) -> (i32, i32) {
    %c0_i32 = arith.constant 0 : i32
    %c0_i32_0 = arith.constant 0 : i32
    return %c0_i32, %arg0 : i32, i32
  }
  func.func @transform_3(%arg0: i32) -> (i32, i32) {
    %c0_i32 = arith.constant 0 : i32
    %c0_i32_0 = arith.constant 0 : i32
    %c0_i32_1 = arith.constant 0 : i32
    return %c0_i32, %c0_i32_0 : i32, i32
  }
  func.func @transform_4(%arg0: i32) -> (i32, i32) {
    %c0_i32 = arith.constant 0 : i32
    %c0_i32_0 = arith.constant 0 : i32
    %c0_i32_1 = arith.constant 0 : i32
    return %c0_i32, %c0_i32_0 : i32, i32
  }
  func.func @transform_5(%arg0: i32) -> (i32, i32) {
    %c0_i32 = arith.constant 0 : i32
    %c0_i32_0 = arith.constant 0 : i32
    return %c0_i32, %arg0 : i32, i32
  }
}

</mosaic_0001>

<llo_original>
// kernel: nethead_forward.2
$region0: #{nethead_forward.2}
  #allocation0 [shape = 'u32[]', space=smem, size = 0x4, offset = 0x4, fixed_abs, tag = 'smem constant byte address 0x4 - core index']
  #allocation1 [shape = 'u32[144,128]{1,0:T(1,128)}', space=vmem, size = 0x12000, scoped, tag = 'internal scratch']
  %s0 = inlined_call_operand.vmem [shape: f32[8,32], index: 0, kind: input, shape index: {}]
  %s1 = inlined_call_operand.vmem [shape: bf16[32,8], index: 1, kind: input, shape index: {}]
  %s2 = inlined_call_operand.vmem [shape: f32[1,8], index: 2, kind: input, shape index: {}]
  %s3 = inlined_call_operand.vmem [shape: f32[8,8], index: 3, kind: output, shape index: {}]
  %s4 = sld [smem:[#allocation0]]
  $region22: #{nethead_forward.2} parent=0
    _
  %s6 = ssub.s32 1, %s4
  %s7 = scalar_select 0, %s6, %s4
  // Predicated region
  $region2: #{nethead_forward.2} parent=0 // pred_check
    _
  $region3: #{nethead_forward.2} parent=0 // pred_check_branch
    %9 = sbr.rel (0) target = $region5
  $region4: #{nethead_forward.2} parent=0 // pred_region
    _
  $region5: #{nethead_forward.2} parent=0 // pred_fallthru
    _
  // Predicated region
  $region6: #{nethead_forward.2} parent=0 // pred_check
    _
  $region7: #{nethead_forward.2} parent=0 // pred_check_branch
    %11 = sbr.rel (0) target = $region9
  $region8: #{nethead_forward.2} parent=0 // pred_region
    _
  $region9: #{nethead_forward.2} parent=0 // pred_fallthru
    _
  // Predicated region
  $region10: #{nethead_forward.2} parent=0 // pred_check
    _
  $region11: #{nethead_forward.2} parent=0 // pred_check_branch
    %13 = sbr.rel (0) target = $region13
  $region12: #{nethead_forward.2} parent=0 // pred_region
    _
  $region13: #{nethead_forward.2} parent=0 // pred_fallthru
    _
  %v15 = vld [vmem:[%s1] sm:$0xf]
  %v16 = vld [vmem:[%s1 + $0x4] sm:$0xf]
  %v17 = vld [vmem:[%s1 + $0x8] sm:$0xf]
  %v18 = vld [vmem:[%s1 + $0xc] sm:$0xf]
  %v19 = vld [vmem:[%s0] sm:$0xff]
  %v20 = vpack.c.bf16 %v19, %v19
  %v21 = vld [vmem:[%s2] sm:$0x1]
  %v23 = vlaneseq
  %v24 = vshrl.u32 %v23, 7
  %v25 = vsub.s32 0, %v24
  %v26 = vrot.slane %v21, %v25
  %v32 = vunpack.c.l.b16 %v15
  %v33 = vunpack.c.l.b16 %v16
  %v34 = vunpack.c.l.b16 %v17
  %v35 = vunpack.c.l.b16 %v18
  %v36 = vpack.c.b16 %v33, %v32
  %v37 = vpack.c.b16 %v35, %v34
  %vm40 = vcmask 261120
  %v42 = vsel %vm40, %v20, 0
  %44 = vmatprep.subr.bf16.mxu0 0
  %45 = vmatpush1.bf16.msra.mxu0 %v36
  %46 = vmatprep.subr.bf16.mxu0 0
  %47 = vmatpush1.bf16.msra.mxu0 %v37
  %48 = vmatprep.subr.bf16.mxu0 0
  %49 = vmatpush1.bf16.msra.mxu0 0
  %50 = vmatprep.subr.bf16.mxu0 0
  %51 = vmatpush1.bf16.msra.mxu0 0
  %52 = vmatprep.subr.bf16.mxu0 0
  %53 = vmatpush1.bf16.msra.mxu0 0
  %54 = vmatprep.subr.bf16.mxu0 0
  %55 = vmatpush1.bf16.msra.mxu0 0
  %56 = vmatprep.subr.bf16.mxu0 0
  %57 = vmatpush1.bf16.msra.mxu0 0
  %58 = vmatprep.subr.bf16.mxu0 0
  %59 = vmatpush1.bf16.msra.mxu0 0
  %60 = vmatprep.subr.bf16.mxu0 0
  %61 = vmatpush1.bf16.msra.mxu0 0
  %62 = vmatprep.subr.bf16.mxu0 0
  %63 = vmatpush1.bf16.msra.mxu0 0
  %64 = vmatprep.subr.bf16.mxu0 0
  %65 = vmatpush1.bf16.msra.mxu0 0
  %66 = vmatprep.subr.bf16.mxu0 0
  %67 = vmatpush1.bf16.msra.mxu0 0
  %68 = vmatprep.subr.bf16.mxu0 0
  %69 = vmatpush1.bf16.msra.mxu0 0
  %70 = vmatprep.subr.bf16.mxu0 0
  %71 = vmatpush1.bf16.msra.mxu0 0
  %72 = vmatprep.subr.bf16.mxu0 0
  %73 = vmatpush1.bf16.msra.mxu0 0
  %74 = vmatprep.subr.bf16.mxu0 0
  %75 = vmatpush1.bf16.msra.mxu0 0
  %76 = vmatprep.mubr.bf16.mxu0 0
  %77 = vmatmul.mubr.bf16.gmra.mrb[0].mxu0 %v42
  %v78 = vpop.f32.mrb[0].mxu0
  %v79 = vadd.f32 %v26, %v78
  %v80 = vpop.f32.mrb[0].mxu0
  %v81 = vpop.f32.mrb[0].mxu0
  %v82 = vpop.f32.mrb[0].mxu0
  %83 = vdwg.mxu0
  %vm84 = vcmask 64512
  %85 = vst.msk [vmem:[%s3] sm:$0xff] %vm84, %v79
  // Predicated region
  $region14: #{nethead_forward.2} parent=0 // pred_check
    _
  $region15: #{nethead_forward.2} parent=0 // pred_check_branch
    %87 = sbr.rel (0) target = $region17
  $region16: #{nethead_forward.2} parent=0 // pred_region
    _
  $region17: #{nethead_forward.2} parent=0 // pred_fallthru
    _
  // Predicated region
  $region18: #{nethead_forward.2} parent=0 // pred_check
    _
  $region19: #{nethead_forward.2} parent=0 // pred_check_branch
    %89 = sbr.rel (0) target = $region21
  $region20: #{nethead_forward.2} parent=0 // pred_region
    _
  $region21: #{nethead_forward.2} parent=0 // pred_fallthru
    _

// kernel: nethead_forward.3
$region0: #{nethead_forward.3}
  #allocation0 [shape = 'u32[]', space=smem, size = 0x4, offset = 0x4, fixed_abs, tag = 'smem constant byte address 0x4 - core index']
  #allocation1 [shape = 'u32[144,128]{1,0:T(1,128)}', space=vmem, size = 0x12000, scoped, tag = 'internal scratch']
  %s0 = inlined_call_operand.vmem [shape: f32[8,32], index: 0, kind: input, shape index: {}]
  %s1 = inlined_call_operand.vmem [shape: bf16[32,8], index: 1, kind: input, shape index: {}]
  %s2 = inlined_call_operand.vmem [shape: f32[1,8], index: 2, kind: input, shape index: {}]
  %s3 = inlined_call_operand.vmem [shape: f32[8,1], index: 3, kind: input, shape index: {}]
  %s4 = inlined_call_operand.vmem [shape: s32[8,1], index: 4, kind: input, shape index: {}]
  %s5 = inlined_call_operand.vmem [shape: f32[8,8], index: 5, kind: output, shape index: {}]
  %s6 = sld [smem:[#allocation0]]
  $region30: #{nethead_forward.3} parent=0
    _
  %s8 = ssub.s32 1, %s6
  %s9 = scalar_select 0, %s8, %s6
  // Predicated region
  $region2: #{nethead_forward.3} parent=0 // pred_check
    _
  $region3: #{nethead_forward.3} parent=0 // pred_check_branch
    %11 = sbr.rel (0) target = $region5
  $region4: #{nethead_forward.3} parent=0 // pred_region
    _
  $region5: #{nethead_forward.3} parent=0 // pred_fallthru
    _
  // Predicated region
  $region6: #{nethead_forward.3} parent=0 // pred_check
    _
  $region7: #{nethead_forward.3} parent=0 // pred_check_branch
    %13 = sbr.rel (0) target = $region9
  $region8: #{nethead_forward.3} parent=0 // pred_region
    _
  $region9: #{nethead_forward.3} parent=0 // pred_fallthru
    _
  // Predicated region
  $region10: #{nethead_forward.3} parent=0 // pred_check
    _
  $region11: #{nethead_forward.3} parent=0 // pred_check_branch
    %15 = sbr.rel (0) target = $region13
  $region12: #{nethead_forward.3} parent=0 // pred_region
    _
  $region13: #{nethead_forward.3} parent=0 // pred_fallthru
    _
  // Predicated region
  $region14: #{nethead_forward.3} parent=0 // pred_check
    _
  $region15: #{nethead_forward.3} parent=0 // pred_check_branch
    %17 = sbr.rel (0) target = $region17
  $region16: #{nethead_forward.3} parent=0 // pred_region
    _
  $region17: #{nethead_forward.3} parent=0 // pred_fallthru
    _
  // Predicated region
  $region18: #{nethead_forward.3} parent=0 // pred_check
    _
  $region19: #{nethead_forward.3} parent=0 // pred_check_branch
    %19 = sbr.rel (0) target = $region21
  $region20: #{nethead_forward.3} parent=0 // pred_region
    _
  $region21: #{nethead_forward.3} parent=0 // pred_fallthru
    _
  %v21 = vld [vmem:[%s1] sm:$0xf]
  %v22 = vld [vmem:[%s1 + $0x4] sm:$0xf]
  %v23 = vld [vmem:[%s1 + $0x8] sm:$0xf]
  %v24 = vld [vmem:[%s1 + $0xc] sm:$0xf]
  %v25 = vld [vmem:[%s0] sm:$0xff]
  %v26 = vpack.c.bf16 %v25, %v25
  %v27 = vld [vmem:[%s2] sm:$0x1]
  %v29 = vlaneseq
  %v30 = vshrl.u32 %v29, 7
  %v31 = vsub.s32 0, %v30
  %v32 = vrot.slane %v27, %v31
  %v38 = vunpack.c.l.b16 %v21
  %v39 = vunpack.c.l.b16 %v22
  %v40 = vunpack.c.l.b16 %v23
  %v41 = vunpack.c.l.b16 %v24
  %v42 = vpack.c.b16 %v39, %v38
  %v43 = vpack.c.b16 %v41, %v40
  %vm46 = vcmask 261120
  %v48 = vsel %vm46, %v26, 0
  %50 = vmatprep.subr.bf16.mxu0 0
  %51 = vmatpush1.bf16.msra.mxu0 %v42
  %52 = vmatprep.subr.bf16.mxu0 0
  %53 = vmatpush1.bf16.msra.mxu0 %v43
  %54 = vmatprep.subr.bf16.mxu0 0
  %55 = vmatpush1.bf16.msra.mxu0 0
  %56 = vmatprep.subr.bf16.mxu0 0
  %57 = vmatpush1.bf16.msra.mxu0 0
  %58 = vmatprep.subr.bf16.mxu0 0
  %59 = vmatpush1.bf16.msra.mxu0 0
  %60 = vmatprep.subr.bf16.mxu0 0
  %61 = vmatpush1.bf16.msra.mxu0 0
  %62 = vmatprep.subr.bf16.mxu0 0
  %63 = vmatpush1.bf16.msra.mxu0 0
  %64 = vmatprep.subr.bf16.mxu0 0
  %65 = vmatpush1.bf16.msra.mxu0 0
  %66 = vmatprep.subr.bf16.mxu0 0
  %67 = vmatpush1.bf16.msra.mxu0 0
  %68 = vmatprep.subr.bf16.mxu0 0
  %69 = vmatpush1.bf16.msra.mxu0 0
  %70 = vmatprep.subr.bf16.mxu0 0
  %71 = vmatpush1.bf16.msra.mxu0 0
  %72 = vmatprep.subr.bf16.mxu0 0
  %73 = vmatpush1.bf16.msra.mxu0 0
  %74 = vmatprep.subr.bf16.mxu0 0
  %75 = vmatpush1.bf16.msra.mxu0 0
  %76 = vmatprep.subr.bf16.mxu0 0
  %77 = vmatpush1.bf16.msra.mxu0 0
  %78 = vmatprep.subr.bf16.mxu0 0
  %79 = vmatpush1.bf16.msra.mxu0 0
  %80 = vmatprep.subr.bf16.mxu0 0
  %81 = vmatpush1.bf16.msra.mxu0 0
  %82 = vmatprep.mubr.bf16.mxu0 0
  %83 = vmatmul.mubr.bf16.gmra.mrb[0].mxu0 %v48
  %v84 = vpop.f32.mrb[0].mxu0
  %v85 = vadd.f32 %v32, %v84
  %v86 = vpop.f32.mrb[0].mxu0
  %v87 = vpop.f32.mrb[0].mxu0
  %v88 = vpop.f32.mrb[0].mxu0
  %89 = vdwg.mxu0
  %v90 = vld [vmem:[%s3] sm:$0xff]
  %92 = vset.pattern.permute.xlu0 0
  %93 = vperm.xlu0 %92, %v90
  %v94 = vpop.permute.xlu0 %93
  %v96 = vmul.f32 %v85, %v94
  %v97 = vmul.f32 %v96, %v96
  %v98 = vsub.f32 1.0, %v97
  %v99 = vmax.f32 %v98, 0.0
  %v100 = vmin.f32 %v99, 1.0
  %v101 = vrsqrt.pop %v100
  %v102 = vmul.f32 %v100, %v101
  %vm103 = vcmp.eq.f32.partialorder %v100, inf
  %v104 = vsel %vm103, %v100, %v102
  %vm105 = vcmp.eq.f32.partialorder %v100, 0.0
  %v106 = vand.u32 %v100, 2147483648
  %v107 = vsel %vm105, %v106, %v104
  %v108 = vmul.f32 %v96, 0.87758255
  %v109 = vmul.f32 %v107, 0.47942555
  %v110 = vsub.f32 %v108, %v109
  %vm111 = vcmp.gt.f32.partialorder %v96, -0.87758255
  %v112 = vsub.f32 %v96, 0.23971277
  %v113 = vsel %vm111, %v110, %v112
  %s114 = smul.u32 0, 8
  %v115 = vlaneseq
  %v116 = vand.u32 %v115, 127
  %v117 = vstv %s114
  %v118 = vadd.s32 %v117, %v116
  %v119 = vld [vmem:[%s4] sm:$0xff]
  %120 = vset.pattern.permute.xlu0 0
  %121 = vperm.xlu0 %120, %v119
  %v122 = vpop.permute.xlu0 %121
  %vm123 = vcmp.eq.s32.totalorder %v118, %v122
  %v124 = vsel %vm123, %v113, %v96
  %v125 = vmul.f32 %v124, 30.0
  %vm126 = vcmask 64512
  %127 = vst.msk [vmem:[%s5] sm:$0xff] %vm126, %v125
  // Predicated region
  $region22: #{nethead_forward.3} parent=0 // pred_check
    _
  $region23: #{nethead_forward.3} parent=0 // pred_check_branch
    %129 = sbr.rel (0) target = $region25
  $region24: #{nethead_forward.3} parent=0 // pred_region
    _
  $region25: #{nethead_forward.3} parent=0 // pred_fallthru
    _
  // Predicated region
  $region26: #{nethead_forward.3} parent=0 // pred_check
    _
  $region27: #{nethead_forward.3} parent=0 // pred_check_branch
    %131 = sbr.rel (0) target = $region29
  $region28: #{nethead_forward.3} parent=0 // pred_region
    _
  $region29: #{nethead_forward.3} parent=0 // pred_fallthru
    _

</llo_original>
